<compile_context>
chip_gen: v6e
topology: v6e:2x2x1
jax: 0.10.0
libtpu: 0.0.40
codegen_flags: <defaults>
</compile_context>

<pallas_src>
import math

import jax
import jax.numpy as jnp
from jax.experimental import pallas as pl
from jax.experimental.pallas import tpu as pltpu

LANES = 512        # lane-dense last dim (multiple of 128)
BLOCK_ROWS = 512   # (512, 512) f32 block = 1 MiB per array per buffer


def _sf_kernel(params_ref, theta_l_ref, theta_v_ref, r_v_ref, w_l_ref, out_ref):
    # Host-precomputed scalar parameters (SMEM).
    k         = params_ref[0]    # -log2(e) / (2*sigma^2)
    slope     = params_ref[1]
    intercept = params_ref[2]
    p_1       = params_ref[3]
    p_3       = params_ref[4]
    two_p2    = params_ref[5]    # 2*p_2
    two_p4    = params_ref[6]    # 2*p_4
    q0        = params_ref[7]    # 1 - p_2 - p_4
    A_1       = params_ref[8]
    A_3       = params_ref[9]
    two_A2    = params_ref[10]   # 2*A_2
    two_A4    = params_ref[11]   # 2*A_4
    a0        = params_ref[12]   # 1 - A_2 - A_4

    theta_l = theta_l_ref[...]
    theta_v = theta_v_ref[...]
    r_v = r_v_ref[...]
    w_l = w_l_ref[...]

    # EUP budget: 2 cos + 1 log2 + 1 exp2 per element.
    c2l = jnp.cos(2.0 * theta_l)
    c2d = jnp.cos(2.0 * (theta_l - theta_v))
    c2l2 = c2l * c2l
    c2d2 = c2d * c2d

    # A_v (formula no. 7); cos(4x) = 2*cos(2x)^2 - 1 folded into host coefficients.
    Av = a0 + A_1 * c2l + A_3 * c2d + two_A2 * c2l2 + two_A4 * c2d2
    Av = jnp.maximum(Av, 1e-6)

    # P_v (formula no. 6), same folding; clamp(min=1e-6).
    ecc = slope * r_v + intercept
    mod = q0 + p_1 * c2l + p_3 * c2d + two_p2 * c2l2 + two_p4 * c2d2
    Pv = jnp.maximum(ecc * mod, 1e-6)

    # Predicted BOLD (formula no. 5).
    # log2(w_l)+log2(Pv) == log2(w_l*Pv) (both > 0 for in-range inputs); exp -> exp2 via k.
    t = jnp.log2(w_l * Pv)
    out_ref[...] = Av * jnp.exp2((t * t) * k)


def spatial_frequency_forward(params, theta_l, theta_v, r_v, w_l):
    """params: dict of python floats; inputs: 1-D float32 arrays of length N."""
    n = theta_l.shape[0]
    rows = pl.cdiv(n, LANES)
    n_pad = rows * LANES

    def prep(x):
        x = jnp.asarray(x, jnp.float32)
        if n_pad != n:
            # TODO(synk): this tail pad (and the matching output slice) copies each array
            # once in HBM. Callers that stream very large voxel vectors should pass N as a
            # multiple of LANES to hit the zero-copy path (the reshape is then a free bitcast).
            x = jnp.pad(x, (0, n_pad - n), constant_values=1.0)  # 1.0 keeps log2 finite in tail
        return x.reshape(rows, LANES)

    theta_l2 = prep(theta_l)
    theta_v2 = prep(theta_v)
    r_v2 = prep(r_v)
    w_l2 = prep(w_l)

    sigma = float(params['sigma'])
    slope = float(params['slope'])
    intercept = float(params['intercept'])
    p_1, p_2 = float(params['p_1']), float(params['p_2'])
    p_3, p_4 = float(params['p_3']), float(params['p_4'])
    A_1, A_2 = float(params['A_1']), float(params['A_2'])
    A_3, A_4 = float(params.get('A_3', 0.0)), float(params.get('A_4', 0.0))

    param_vec = jnp.array(
        [-math.log2(math.e) / (2.0 * sigma * sigma),
         slope, intercept,
         p_1, p_3, 2.0 * p_2, 2.0 * p_4, 1.0 - p_2 - p_4,
         A_1, A_3, 2.0 * A_2, 2.0 * A_4, 1.0 - A_2 - A_4],
        dtype=jnp.float32)

    # Tile selection:
    #  - rows > BLOCK_ROWS: stream 512-row tiles (1 MiB/array).
    #  - 16 <= rows <= BLOCK_ROWS: split into exactly 2 grid steps (8-row aligned blocks) so
    #    a v7x megacore can put one step on each TensorCore.
    #  - rows < 16: single full-array block (block dims equal array dims; grid of 1).
    if rows > BLOCK_ROWS:
        block_rows = BLOCK_ROWS
    elif rows >= 16:
        block_rows = (((rows + 1) // 2) + 7) // 8 * 8   # ceil(rows/2) rounded up to 8
    else:
        block_rows = rows
    grid = (pl.cdiv(rows, block_rows),)
    vmem_spec = pl.BlockSpec((block_rows, LANES), lambda i: (i, 0))

    elems = rows * LANES
    cost = pl.CostEstimate(flops=30 * elems,
                           transcendentals=4 * elems,
                           bytes_accessed=5 * 4 * elems)   # 4 f32 in + 1 f32 out per element

    out = pl.pallas_call(
        _sf_kernel,
        out_shape=jax.ShapeDtypeStruct((rows, LANES), jnp.float32),
        grid=grid,
        in_specs=[
            pl.BlockSpec(memory_space=pltpu.SMEM),   # 13 precomputed scalar params
            vmem_spec, vmem_spec, vmem_spec, vmem_spec,
        ],
        out_specs=vmem_spec,
        compiler_params=pltpu.CompilerParams(
            dimension_semantics=("parallel",)),      # grid steps independent -> megacore shardable
        cost_estimate=cost,
    )(param_vec, theta_l2, theta_v2, r_v2, w_l2)

    out = out.reshape(-1)
    return out if n_pad == n else out[:n]


def _reference_forward(params, theta_l, theta_v, r_v, w_l):
    """Pure-JAX reference mirroring the PyTorch forward()."""
    sigma, slope, intercept = params['sigma'], params['slope'], params['intercept']
    p_1, p_2, p_3, p_4 = params['p_1'], params['p_2'], params['p_3'], params['p_4']
    A_1, A_2 = params['A_1'], params['A_2']
    A_3, A_4 = params.get('A_3', 0.0), params.get('A_4', 0.0)
    Av = 1 + A_1 * jnp.cos(2 * theta_l) + A_2 * jnp.cos(4 * theta_l) \
         + A_3 * jnp.cos(2 * (theta_l - theta_v)) + A_4 * jnp.cos(4 * (theta_l - theta_v))
    Av = jnp.clip(Av, 1e-6, None)
    ecc = slope * r_v + intercept
    Pv = ecc * (1 + p_1 * jnp.cos(2 * theta_l) + p_2 * jnp.cos(4 * theta_l)
                + p_3 * jnp.cos(2 * (theta_l - theta_v)) + p_4 * jnp.cos(4 * (theta_l - theta_v)))
    Pv = jnp.clip(Pv, 1e-6, None)
    return Av * jnp.exp(-(jnp.log2(w_l) + jnp.log2(Pv)) ** 2 / (2 * sigma ** 2))


if __name__ == "__main__":
    # Deterministic parameter initialization (model=7: all scalars; A_3=A_4=0).
    params = {
        'sigma': 0.85, 'slope': 0.12, 'intercept': 0.35,
        'p_1': 0.06, 'p_2': 0.04, 'p_3': 0.03, 'p_4': 0.02,
        'A_1': 0.05, 'A_2': 0.03, 'A_3': 0.0, 'A_4': 0.0,
    }

    key = jax.random.PRNGKey(0)
    # N=1000 exercises the ragged/tail-pad path; N=8192 exercises the zero-copy,
    # 2-step-grid (megacore-shardable) path.
    for N in (1000, 8192):
        k1, k2, k3, k4 = jax.random.split(jax.random.fold_in(key, N), 4)
        theta_l = jax.random.uniform(k1, (N,), jnp.float32, -jnp.pi, jnp.pi)   # local orientation
        theta_v = jax.random.uniform(k2, (N,), jnp.float32, -jnp.pi, jnp.pi)   # voxel polar angle
        r_v = jax.random.uniform(k3, (N,), jnp.float32, 0.5, 12.0)             # eccentricity (deg)
        w_l = jax.random.uniform(k4, (N,), jnp.float32, 0.5, 30.0)             # local spatial freq

        pred = spatial_frequency_forward(params, theta_l, theta_v, r_v, w_l)
        pred = jax.block_until_ready(pred)

        ref = _reference_forward(params, theta_l, theta_v, r_v, w_l)
        assert pred.shape == (N,) and pred.dtype == jnp.float32
        assert jnp.allclose(pred, ref, rtol=2e-4, atol=1e-6), f"mismatch vs reference (N={N})"

    print("KERNEL_OK")
</pallas_src>

<mosaic_0001>
module attributes {stable_mosaic.version = 11 : i64} {
  func.func @_sf_kernel(%arg0: i32, %arg1: memref<13xf32, #tpu.memory_space<smem>>, %arg2: memref<2x512xf32, #tpu.memory_space<vmem>>, %arg3: memref<2x512xf32, #tpu.memory_space<vmem>>, %arg4: memref<2x512xf32, #tpu.memory_space<vmem>>, %arg5: memref<2x512xf32, #tpu.memory_space<vmem>>, %arg6: memref<2x512xf32, #tpu.memory_space<vmem>>) attributes {dimension_semantics = [#tpu.dimension_semantics<parallel>], iteration_bounds = array<i64: 1>, scalar_prefetch = 0 : i64, scratch_operands = 0 : i64, tpu.core_type = #tpu.core_type<tc>, window_params = [{transform_indices = @transform_0, window_bounds = array<i64: 13>}, {transform_indices = @transform_1, window_bounds = array<i64: 2, 512>}, {transform_indices = @transform_2, window_bounds = array<i64: 2, 512>}, {transform_indices = @transform_3, window_bounds = array<i64: 2, 512>}, {transform_indices = @transform_4, window_bounds = array<i64: 2, 512>}, {transform_indices = @transform_5, window_bounds = array<i64: 2, 512>}]} {
    %c0 = arith.constant 0 : index
    %0 = memref.load %arg1[%c0] : memref<13xf32, #tpu.memory_space<smem>>
    %c1 = arith.constant 1 : index
    %1 = memref.load %arg1[%c1] : memref<13xf32, #tpu.memory_space<smem>>
    %c2 = arith.constant 2 : index
    %2 = memref.load %arg1[%c2] : memref<13xf32, #tpu.memory_space<smem>>
    %c3 = arith.constant 3 : index
    %3 = memref.load %arg1[%c3] : memref<13xf32, #tpu.memory_space<smem>>
    %c4 = arith.constant 4 : index
    %4 = memref.load %arg1[%c4] : memref<13xf32, #tpu.memory_space<smem>>
    %c5 = arith.constant 5 : index
    %5 = memref.load %arg1[%c5] : memref<13xf32, #tpu.memory_space<smem>>
    %c6 = arith.constant 6 : index
    %6 = memref.load %arg1[%c6] : memref<13xf32, #tpu.memory_space<smem>>
    %c7 = arith.constant 7 : index
    %7 = memref.load %arg1[%c7] : memref<13xf32, #tpu.memory_space<smem>>
    %c8 = arith.constant 8 : index
    %8 = memref.load %arg1[%c8] : memref<13xf32, #tpu.memory_space<smem>>
    %c9 = arith.constant 9 : index
    %9 = memref.load %arg1[%c9] : memref<13xf32, #tpu.memory_space<smem>>
    %c10 = arith.constant 10 : index
    %10 = memref.load %arg1[%c10] : memref<13xf32, #tpu.memory_space<smem>>
    %c11 = arith.constant 11 : index
    %11 = memref.load %arg1[%c11] : memref<13xf32, #tpu.memory_space<smem>>
    %c12 = arith.constant 12 : index
    %12 = memref.load %arg1[%c12] : memref<13xf32, #tpu.memory_space<smem>>
    %c0_0 = arith.constant 0 : index
    %c0_1 = arith.constant 0 : index
    %13 = vector.load %arg2[%c0_0, %c0_1] : memref<2x512xf32, #tpu.memory_space<vmem>>, vector<2x512xf32>
    %c0_2 = arith.constant 0 : index
    %c0_3 = arith.constant 0 : index
    %14 = vector.load %arg3[%c0_2, %c0_3] : memref<2x512xf32, #tpu.memory_space<vmem>>, vector<2x512xf32>
    %c0_4 = arith.constant 0 : index
    %c0_5 = arith.constant 0 : index
    %15 = vector.load %arg4[%c0_4, %c0_5] : memref<2x512xf32, #tpu.memory_space<vmem>>, vector<2x512xf32>
    %c0_6 = arith.constant 0 : index
    %c0_7 = arith.constant 0 : index
    %16 = vector.load %arg5[%c0_6, %c0_7] : memref<2x512xf32, #tpu.memory_space<vmem>>, vector<2x512xf32>
    %cst = arith.constant 2.000000e+00 : f32
    %17 = vector.broadcast %cst : f32 to vector<2x512xf32>
    %18 = arith.mulf %17, %13 : vector<2x512xf32>
    %19 = math.cos %18 : vector<2x512xf32>
    %20 = arith.subf %13, %14 : vector<2x512xf32>
    %cst_8 = arith.constant 2.000000e+00 : f32
    %21 = vector.broadcast %cst_8 : f32 to vector<2x512xf32>
    %22 = arith.mulf %21, %20 : vector<2x512xf32>
    %23 = math.cos %22 : vector<2x512xf32>
    %24 = arith.mulf %19, %19 : vector<2x512xf32>
    %25 = arith.mulf %23, %23 : vector<2x512xf32>
    %26 = vector.broadcast %8 : f32 to vector<2x512xf32>
    %27 = arith.mulf %26, %19 : vector<2x512xf32>
    %28 = vector.broadcast %12 : f32 to vector<2x512xf32>
    %29 = arith.addf %28, %27 : vector<2x512xf32>
    %30 = vector.broadcast %9 : f32 to vector<2x512xf32>
    %31 = arith.mulf %30, %23 : vector<2x512xf32>
    %32 = arith.addf %29, %31 : vector<2x512xf32>
    %33 = vector.broadcast %10 : f32 to vector<2x512xf32>
    %34 = arith.mulf %33, %24 : vector<2x512xf32>
    %35 = arith.addf %32, %34 : vector<2x512xf32>
    %36 = vector.broadcast %11 : f32 to vector<2x512xf32>
    %37 = arith.mulf %36, %25 : vector<2x512xf32>
    %38 = arith.addf %35, %37 : vector<2x512xf32>
    %cst_9 = arith.constant 9.99999997E-7 : f32
    %39 = vector.broadcast %cst_9 : f32 to vector<2x512xf32>
    %40 = arith.maximumf %38, %39 : vector<2x512xf32>
    %41 = vector.broadcast %1 : f32 to vector<2x512xf32>
    %42 = arith.mulf %41, %15 : vector<2x512xf32>
    %43 = vector.broadcast %2 : f32 to vector<2x512xf32>
    %44 = arith.addf %42, %43 : vector<2x512xf32>
    %45 = vector.broadcast %3 : f32 to vector<2x512xf32>
    %46 = arith.mulf %45, %19 : vector<2x512xf32>
    %47 = vector.broadcast %7 : f32 to vector<2x512xf32>
    %48 = arith.addf %47, %46 : vector<2x512xf32>
    %49 = vector.broadcast %4 : f32 to vector<2x512xf32>
    %50 = arith.mulf %49, %23 : vector<2x512xf32>
    %51 = arith.addf %48, %50 : vector<2x512xf32>
    %52 = vector.broadcast %5 : f32 to vector<2x512xf32>
    %53 = arith.mulf %52, %24 : vector<2x512xf32>
    %54 = arith.addf %51, %53 : vector<2x512xf32>
    %55 = vector.broadcast %6 : f32 to vector<2x512xf32>
    %56 = arith.mulf %55, %25 : vector<2x512xf32>
    %57 = arith.addf %54, %56 : vector<2x512xf32>
    %58 = arith.mulf %44, %57 : vector<2x512xf32>
    %cst_10 = arith.constant 9.99999997E-7 : f32
    %59 = vector.broadcast %cst_10 : f32 to vector<2x512xf32>
    %60 = arith.maximumf %58, %59 : vector<2x512xf32>
    %61 = arith.mulf %16, %60 : vector<2x512xf32>
    %62 = math.log %61 : vector<2x512xf32>
    %cst_11 = arith.constant 2.000000e+00 : f32
    %63 = math.log %cst_11 : f32
    %64 = vector.broadcast %63 : f32 to vector<2x512xf32>
    %65 = arith.divf %62, %64 : vector<2x512xf32>
    %66 = arith.mulf %65, %65 : vector<2x512xf32>
    %67 = vector.broadcast %0 : f32 to vector<2x512xf32>
    %68 = arith.mulf %66, %67 : vector<2x512xf32>
    %69 = math.exp2 %68 : vector<2x512xf32>
    %70 = arith.mulf %40, %69 : vector<2x512xf32>
    %c0_12 = arith.constant 0 : index
    %c0_13 = arith.constant 0 : index
    %71 = vector.load %arg6[%c0_12, %c0_13] : memref<2x512xf32, #tpu.memory_space<vmem>>, vector<2x512xf32>
    tpu.vector_store %arg6[%c0_12, %c0_13], %70 {strides = array<i32>} : memref<2x512xf32, #tpu.memory_space<vmem>>, vector<2x512xf32>,
    return
  }
  func.func @transform_0(%arg0: i32) -> i32 {
    %c0_i32 = arith.constant 0 : i32
    %c0_i32_0 = arith.constant 0 : i32
    return %c0_i32 : i32
  }
  func.func @transform_1(%arg0: i32) -> (i32, i32) {
    %c0_i32 = arith.constant 0 : i32
    %c0_i32_0 = arith.constant 0 : i32
    return %arg0, %c0_i32 : i32, i32
  }
  func.func @transform_2(%arg0: i32) -> (i32, i32) {
    %c0_i32 = arith.constant 0 : i32
    %c0_i32_0 = arith.constant 0 : i32
    return %arg0, %c0_i32 : i32, i32
  }
  func.func @transform_3(%arg0: i32) -> (i32, i32) {
    %c0_i32 = arith.constant 0 : i32
    %c0_i32_0 = arith.constant 0 : i32
    return %arg0, %c0_i32 : i32, i32
  }
  func.func @transform_4(%arg0: i32) -> (i32, i32) {
    %c0_i32 = arith.constant 0 : i32
    %c0_i32_0 = arith.constant 0 : i32
    return %arg0, %c0_i32 : i32, i32
  }
  func.func @transform_5(%arg0: i32) -> (i32, i32) {
    %c0_i32 = arith.constant 0 : i32
    %c0_i32_0 = arith.constant 0 : i32
    return %arg0, %c0_i32 : i32, i32
  }
}

</mosaic_0001>

<llo_original>
// kernel: tpu_custom_call.1
$region0: #{tpu_custom_call.1}
  #allocation0 [shape = 'u32[]', space=smem, size = 0x4, offset = 0x4, fixed_abs, tag = 'smem constant byte address 0x4 - core index']
  #allocation1 [shape = 'u32[144,128]{1,0:T(1,128)}', space=vmem, size = 0x12000, scoped, tag = 'internal scratch']
  %s0 = inlined_call_operand.hbm [shape: f32[13], index: 0, kind: input, shape index: {}]
  %s1 = inlined_call_operand.hbm [shape: f32[2,512], index: 1, kind: input, shape index: {}]
  %s2 = inlined_call_operand.hbm [shape: f32[2,512], index: 2, kind: input, shape index: {}]
  %s3 = inlined_call_operand.hbm [shape: f32[2,512], index: 3, kind: input, shape index: {}]
  %s4 = inlined_call_operand.hbm [shape: f32[2,512], index: 4, kind: input, shape index: {}]
  %s5 = inlined_call_operand.hbm [shape: f32[2,512], index: 5, kind: output, shape index: {}]
  %s6 = sld [smem:[#allocation0]]
  $region50: #{tpu_custom_call.1} parent=0
    _
  %s8 = ssub.s32 1, %s6
  %s9 = scalar_select 0, %s8, %s6
  $region1: #{tpu_custom_call.1} parent=0
    #allocation2 [shape = 'u8[512]{0}', space=smem, size = 0x200, scoped, tag = 'input window, operand 0, single buffered']
    #allocation3 [shape = 's32[1]{0}', space=sflag, size = 0x4, scoped, tag = 'scoped memory for tpu_custom_call.1']
    #allocation4 [shape = 's32[1]{0}', space=sflag, size = 0x4, scoped, tag = 'scoped memory for tpu_custom_call.1']
    #allocation5 [shape = 's32[1]{0}', space=sflag, size = 0x4, scoped, tag = 'scoped memory for tpu_custom_call.1']
    #allocation6 [shape = 'u8[4096]{0}', space=vmem, size = 0x1000, scoped, tag = 'input window, operand 1, single buffered']
    #allocation7 [shape = 'u8[4096]{0}', space=vmem, size = 0x1000, scoped, tag = 'input window, operand 2, single buffered']
    #allocation8 [shape = 's32[1]{0}', space=sflag, size = 0x4, scoped, tag = 'scoped memory for tpu_custom_call.1']
    #allocation9 [shape = 'u8[4096]{0}', space=vmem, size = 0x1000, scoped, tag = 'input window, operand 3, single buffered']
    #allocation10 [shape = 'u8[4096]{0}', space=vmem, size = 0x1000, scoped, tag = 'input window, operand 4, single buffered']
    #allocation11 [shape = 's32[1]{0}', space=sflag, size = 0x4, scoped, tag = 'scoped memory for tpu_custom_call.1']
    #allocation12 [shape = 'u8[4096]{0}', space=vmem, size = 0x1000, scoped, tag = 'output window, operand 0, single buffered']
    %10 = vsyncpa [#allocation5], 0
    %11 = vsyncpa [#allocation3], 0
    %12 = vsyncpa [#allocation8], 0
    %13 = vsyncpa [#allocation11], 0
    %14 = vsyncpa [#allocation4], 0
    // Predicated region
    $region2: #{tpu_custom_call.1} parent=1 // pred_check
      _
    $region3: #{tpu_custom_call.1} parent=1 // pred_check_branch
      %16 = sbr.rel (0) target = $region5
    $region4: #{tpu_custom_call.1} parent=1 // pred_region
      %s18 = ssub.s32 16, 16
      %19 = vsyncadd [#allocation5], %s18
      %22 = dma.hbm_to_smem %s0, 16, [#allocation2], [#allocation5]
    $region5: #{tpu_custom_call.1} parent=1 // pred_fallthru
      _
    // Predicated region
    $region6: #{tpu_custom_call.1} parent=1 // pred_check
      _
    $region7: #{tpu_custom_call.1} parent=1 // pred_check_branch
      %24 = sbr.rel (0) target = $region9
    $region8: #{tpu_custom_call.1} parent=1 // pred_region
      %s26 = ssub.s32 128, 128
      %27 = vsyncadd [#allocation3], %s26
      %s29 = sshll.u32 [#allocation6], 4
      %s30 = int_to_ptr.vmem [resolvable:$true] %s29
      %32 = dma.hbm_to_vmem [thread:$0]  %s1, 128, %s30, [#allocation3]
    $region9: #{tpu_custom_call.1} parent=1 // pred_fallthru
      _
    // Predicated region
    $region10: #{tpu_custom_call.1} parent=1 // pred_check
      _
    $region11: #{tpu_custom_call.1} parent=1 // pred_check_branch
      %34 = sbr.rel (0) target = $region13
    $region12: #{tpu_custom_call.1} parent=1 // pred_region
      %s36 = ssub.s32 128, 128
      %37 = vsyncadd [#allocation8], %s36
      %s39 = sshll.u32 [#allocation7], 4
      %s40 = int_to_ptr.vmem [resolvable:$true] %s39
      %42 = dma.hbm_to_vmem [thread:$0]  %s2, 128, %s40, [#allocation8]
    $region13: #{tpu_custom_call.1} parent=1 // pred_fallthru
      _
    // Predicated region
    $region14: #{tpu_custom_call.1} parent=1 // pred_check
      _
    $region15: #{tpu_custom_call.1} parent=1 // pred_check_branch
      %44 = sbr.rel (0) target = $region17
    $region16: #{tpu_custom_call.1} parent=1 // pred_region
      %s46 = ssub.s32 128, 128
      %47 = vsyncadd [#allocation8], %s46
      %s49 = sshll.u32 [#allocation9], 4
      %s50 = int_to_ptr.vmem [resolvable:$true] %s49
      %52 = dma.hbm_to_vmem [thread:$0]  %s3, 128, %s50, [#allocation8]
    $region17: #{tpu_custom_call.1} parent=1 // pred_fallthru
      _
    // Predicated region
    $region18: #{tpu_custom_call.1} parent=1 // pred_check
      _
    $region19: #{tpu_custom_call.1} parent=1 // pred_check_branch
      %54 = sbr.rel (0) target = $region21
    $region20: #{tpu_custom_call.1} parent=1 // pred_region
      %s56 = ssub.s32 128, 128
      %57 = vsyncadd [#allocation11], %s56
      %s59 = sshll.u32 [#allocation10], 4
      %s60 = int_to_ptr.vmem [resolvable:$true] %s59
      %62 = dma.hbm_to_vmem [thread:$0]  %s4, 128, %s60, [#allocation11]
    $region21: #{tpu_custom_call.1} parent=1 // pred_fallthru
      _
    // Predicated region
    $region22: #{tpu_custom_call.1} parent=1 // pred_check
      _
    $region23: #{tpu_custom_call.1} parent=1 // pred_check_branch
      %64 = sbr.rel (0) target = $region25
    $region24: #{tpu_custom_call.1} parent=1 // pred_region
      %65 = dma.done [#allocation5], 16
    $region25: #{tpu_custom_call.1} parent=1 // pred_fallthru
      _
    // Predicated region
    $region26: #{tpu_custom_call.1} parent=1 // pred_check
      _
    $region27: #{tpu_custom_call.1} parent=1 // pred_check_branch
      %67 = sbr.rel (0) target = $region29
    $region28: #{tpu_custom_call.1} parent=1 // pred_region
      %68 = dma.done [#allocation3], 128
    $region29: #{tpu_custom_call.1} parent=1 // pred_fallthru
      _
    // Predicated region
    $region30: #{tpu_custom_call.1} parent=1 // pred_check
      _
    $region31: #{tpu_custom_call.1} parent=1 // pred_check_branch
      %70 = sbr.rel (0) target = $region33
    $region32: #{tpu_custom_call.1} parent=1 // pred_region
      %71 = dma.done [#allocation8], 128
    $region33: #{tpu_custom_call.1} parent=1 // pred_fallthru
      _
    // Predicated region
    $region34: #{tpu_custom_call.1} parent=1 // pred_check
      _
    $region35: #{tpu_custom_call.1} parent=1 // pred_check_branch
      %73 = sbr.rel (0) target = $region37
    $region36: #{tpu_custom_call.1} parent=1 // pred_region
      %74 = dma.done [#allocation8], 128
    $region37: #{tpu_custom_call.1} parent=1 // pred_fallthru
      _
    // Predicated region
    $region38: #{tpu_custom_call.1} parent=1 // pred_check
      _
    $region39: #{tpu_custom_call.1} parent=1 // pred_check_branch
      %76 = sbr.rel (0) target = $region41
    $region40: #{tpu_custom_call.1} parent=1 // pred_region
      %77 = dma.done [#allocation11], 128
    $region41: #{tpu_custom_call.1} parent=1 // pred_fallthru
      _
    %78 = sfence
    %s79 = sld [smem:[#allocation2]]
    %s80 = sld [smem:[#allocation2 + $0x1]]
    %s81 = sld [smem:[#allocation2 + $0x2]]
    %s82 = sld [smem:[#allocation2 + $0x3]]
    %s83 = sld [smem:[#allocation2 + $0x4]]
    %s84 = sld [smem:[#allocation2 + $0x5]]
    %s85 = sld [smem:[#allocation2 + $0x6]]
    %s86 = sld [smem:[#allocation2 + $0x7]]
    %s87 = sld [smem:[#allocation2 + $0x8]]
    %s88 = sld [smem:[#allocation2 + $0x9]]
    %s89 = sld [smem:[#allocation2 + $0xa]]
    %s90 = sld [smem:[#allocation2 + $0xb]]
    %s91 = sld [smem:[#allocation2 + $0xc]]
    %v92 = vld [vmem:[#allocation6] sm:$0xff]
    %v93 = vld [vmem:[#allocation7] sm:$0xff]
    %v94 = vld [vmem:[#allocation9] sm:$0xff]
    %v95 = vld [vmem:[#allocation10] sm:$0xff]
    %v96 = vmul.f32 %v92, 2.0
    %v97 = vand.u32 2147483647, %v96
    %vm98 = vcmp.le.f32.partialorder %v97, 0.7853982
    %vm99 = vcmp.lt.s32.totalorder %v96, 0
    %v100 = vand.u32 %v96, 2139095040
    %v101 = vshrl.u32 %v100, 23
    %v102 = vsub.s32 %v101, 127
    %v103 = vand.u32 2147483647, %v96
    %v104 = vand.u32 %v103, 8388607
    %v105 = vor.u32 %v104, 8388608
    %v106 = vsub.s32 0, %v105
    %v107 = vadd.s32 %v102, 1
    %vm108 = vcmp.gt.s32.totalorder %v107, 0
    %v109 = vsel %vm108, %v107, 0
    %v110 = vshrl.u32 %v109, 5
    %v111 = vand.u32 %v109, 31
    %v112 = vsub.s32 32, %v111
    %v113 = vshrl.u32 683565275, %v112
    %v114 = vshll.u32 683565275, %v111
    %v115 = vshrl.u32 2475754826, %v112
    %v116 = vor.u32 %v114, %v115
    %v117 = vshll.u32 2475754826, %v111
    %v118 = vshrl.u32 2131351028, %v112
    %v119 = vor.u32 %v117, %v118
    %v120 = vshll.u32 2131351028, %v111
    %v121 = vshrl.u32 2102212464, %v112
    %v122 = vor.u32 %v120, %v121
    %v123 = vshll.u32 2102212464, %v111
    %v124 = vshrl.u32 920167782, %v112
    %v125 = vor.u32 %v123, %v124
    %v126 = vshll.u32 920167782, %v111
    %v127 = vshrl.u32 1326507024, %v112
    %v128 = vor.u32 %v126, %v127
    %vm129 = vcmp.lt.s32.totalorder %v110, 1
    %vm130 = vcmp.lt.s32.totalorder %v110, 2
    %vm131 = vcmp.lt.s32.totalorder %v110, 3
    %vm132 = vcmp.lt.s32.totalorder %v110, 4
    %v133 = vsel %vm129, %v113, %v116
    %v134 = vsel %vm132, %v122, 2102212464
    %v135 = vsel %vm131, %v119, %v134
    %v136 = vsel %vm130, %v133, %v135
    %v137 = vsel %vm129, %v116, %v119
    %v138 = vsel %vm132, %v125, 920167782
    %v139 = vsel %vm131, %v122, %v138
    %v140 = vsel %vm130, %v137, %v139
    %v141 = vsel %vm129, %v119, %v122
    %v142 = vsel %vm132, %v128, 1326507024
    %v143 = vsel %vm131, %v125, %v142
    %v144 = vsel %vm130, %v141, %v143
    %v145 = vshll.u32 %v105, 8
    %v146 = vmul.u32.u64.compose %v145, %v144
    %v147 = vextract.low.u32 %v146
    %v148 = vextract.high.u32 %v146
    %v149 = vmul.u32.u64.compose %v145, %v140
    %v150 = vextract.low.u32 %v149
    %v151 = vextract.high.u32 %v149
    %v152 = vmul.u32 %v145, %v136
    %v153 = vadd.s32 %v148, %v150
    %vm154 = vc.u32 %v148, %v150
    %v155 = vadd.s32 %v151, 1
    %v156 = vsel %vm154, %v155, %v151
    %v157 = vadd.s32 %v152, %v156
    %v158 = vadd.s32 %v157, 536870912
    %v159 = vshrl.u32 %v158, 30
    %v160 = vshll.u32 %v159, 30
    %v161 = vsub.s32 %v157, %v160
    %vm162 = vcmp.lt.s32.totalorder %v161, 0
    %v163 = vsub.s32 0, %v161
    %v164 = vsel %vm162, %v163, %v161
    %v165 = vclz %v164
    %v166 = vsub.s32 %v165, 2
    %vm167 = vcmp.gt.s32.totalorder 0, %v166
    %v168 = vsel %vm167, 0, %v166
    %v169 = vsub.s32 32, %v168
    %v170 = vshll.u32 %v161, %v168
    %v171 = vshrl.u32 %v153, %v169
    %v172 = vor.u32 %v170, %v171
    %v173 = vsub.s32 4294967266, %v168
    %v174 = vadd.s32 %v173, 127
    %v175 = vshll.u32 %v174, 23
    %v176 = vor.u32 4788187, %v175
    %v177 = vand.u32 2147483647, %v176
    %v179 = vcvt.s32.f32 %v172
    %v180 = vmul.f32 %v179, %v177
    %v181 = vxor.u32 %v180, 2147483648
    %v182 = vsel %vm99, %v181, %v180
    %v183 = vsub.s32 4, %v159
    %v184 = vsel %vm99, %v183, %v159
    %v185 = vsel %vm98, %v96, %v182
    %v186 = vsel %vm98, 0, %v184
    %v187 = vcosq.f32.pop %v185
    %v188 = vsinq.f32.pop %v185
    %vm189 = vweird.f32 %v96
    %v190 = vand.u32 %v186, 3
    %vm191 = vcmp.lt.s32.totalorder %v190, 2
    %vm192 = vcmp.eq.s32.totalorder %v190, 0
    %v193 = vxor.u32 %v188, 2147483648
    %v194 = vsel %vm192, %v187, %v193
    %vm195 = vcmp.eq.s32.totalorder %v190, 2
    %v196 = vxor.u32 %v187, 2147483648
    %v197 = vsel %vm195, %v196, %v188
    %v198 = vsel %vm191, %v194, %v197
    %v199 = vsel %vm189, nan, %v198
    %v200 = vsub.f32 %v92, %v93
    %v201 = vmul.f32 %v200, 2.0
    %v202 = vand.u32 2147483647, %v201
    %vm203 = vcmp.le.f32.partialorder %v202, 0.7853982
    %vm204 = vcmp.lt.s32.totalorder %v201, 0
    %v205 = vand.u32 %v201, 2139095040
    %v206 = vshrl.u32 %v205, 23
    %v207 = vsub.s32 %v206, 127
    %v208 = vand.u32 2147483647, %v201
    %v209 = vand.u32 %v208, 8388607
    %v210 = vor.u32 %v209, 8388608
    %v211 = vsub.s32 0, %v210
    %v212 = vadd.s32 %v207, 1
    %vm213 = vcmp.gt.s32.totalorder %v212, 0
    %v214 = vsel %vm213, %v212, 0
    %v215 = vshrl.u32 %v214, 5
    %v216 = vand.u32 %v214, 31
    %v217 = vsub.s32 32, %v216
    %v218 = vshrl.u32 683565275, %v217
    %v219 = vshll.u32 683565275, %v216
    %v220 = vshrl.u32 2475754826, %v217
    %v221 = vor.u32 %v219, %v220
    %v222 = vshll.u32 2475754826, %v216
    %v223 = vshrl.u32 2131351028, %v217
    %v224 = vor.u32 %v222, %v223
    %v225 = vshll.u32 2131351028, %v216
    %v226 = vshrl.u32 2102212464, %v217
    %v227 = vor.u32 %v225, %v226
    %v228 = vshll.u32 2102212464, %v216
    %v229 = vshrl.u32 920167782, %v217
    %v230 = vor.u32 %v228, %v229
    %v231 = vshll.u32 920167782, %v216
    %v232 = vshrl.u32 1326507024, %v217
    %v233 = vor.u32 %v231, %v232
    %vm234 = vcmp.lt.s32.totalorder %v215, 1
    %vm235 = vcmp.lt.s32.totalorder %v215, 2
    %vm236 = vcmp.lt.s32.totalorder %v215, 3
    %vm237 = vcmp.lt.s32.totalorder %v215, 4
    %v238 = vsel %vm234, %v218, %v221
    %v239 = vsel %vm237, %v227, 2102212464
    %v240 = vsel %vm236, %v224, %v239
    %v241 = vsel %vm235, %v238, %v240
    %v242 = vsel %vm234, %v221, %v224
    %v243 = vsel %vm237, %v230, 920167782
    %v244 = vsel %vm236, %v227, %v243
    %v245 = vsel %vm235, %v242, %v244
    %v246 = vsel %vm234, %v224, %v227
    %v247 = vsel %vm237, %v233, 1326507024
    %v248 = vsel %vm236, %v230, %v247
    %v249 = vsel %vm235, %v246, %v248
    %v250 = vshll.u32 %v210, 8
    %v251 = vmul.u32.u64.compose %v250, %v249
    %v252 = vextract.low.u32 %v251
    %v253 = vextract.high.u32 %v251
    %v254 = vmul.u32.u64.compose %v250, %v245
    %v255 = vextract.low.u32 %v254
    %v256 = vextract.high.u32 %v254
    %v257 = vmul.u32 %v250, %v241
    %v258 = vadd.s32 %v253, %v255
    %vm259 = vc.u32 %v253, %v255
    %v260 = vadd.s32 %v256, 1
    %v261 = vsel %vm259, %v260, %v256
    %v262 = vadd.s32 %v257, %v261
    %v263 = vadd.s32 %v262, 536870912
    %v264 = vshrl.u32 %v263, 30
    %v265 = vshll.u32 %v264, 30
    %v266 = vsub.s32 %v262, %v265
    %vm267 = vcmp.lt.s32.totalorder %v266, 0
    %v268 = vsub.s32 0, %v266
    %v269 = vsel %vm267, %v268, %v266
    %v270 = vclz %v269
    %v271 = vsub.s32 %v270, 2
    %vm272 = vcmp.gt.s32.totalorder 0, %v271
    %v273 = vsel %vm272, 0, %v271
    %v274 = vsub.s32 32, %v273
    %v275 = vshll.u32 %v266, %v273
    %v276 = vshrl.u32 %v258, %v274
    %v277 = vor.u32 %v275, %v276
    %v278 = vsub.s32 4294967266, %v273
    %v279 = vadd.s32 %v278, 127
    %v280 = vshll.u32 %v279, 23
    %v281 = vor.u32 4788187, %v280
    %v282 = vand.u32 2147483647, %v281
    %v284 = vcvt.s32.f32 %v277
    %v285 = vmul.f32 %v284, %v282
    %v286 = vxor.u32 %v285, 2147483648
    %v287 = vsel %vm204, %v286, %v285
    %v288 = vsub.s32 4, %v264
    %v289 = vsel %vm204, %v288, %v264
    %v290 = vsel %vm203, %v201, %v287
    %v291 = vsel %vm203, 0, %v289
    %v292 = vcosq.f32.pop %v290
    %v293 = vsinq.f32.pop %v290
    %vm294 = vweird.f32 %v201
    %v295 = vand.u32 %v291, 3
    %vm296 = vcmp.lt.s32.totalorder %v295, 2
    %vm297 = vcmp.eq.s32.totalorder %v295, 0
    %v298 = vxor.u32 %v293, 2147483648
    %v299 = vsel %vm297, %v292, %v298
    %vm300 = vcmp.eq.s32.totalorder %v295, 2
    %v301 = vxor.u32 %v292, 2147483648
    %v302 = vsel %vm300, %v301, %v293
    %v303 = vsel %vm296, %v299, %v302
    %v304 = vsel %vm294, nan, %v303
    %v305 = vmul.f32 %v199, %v199
    %v306 = vmul.f32 %v304, %v304
    %v307 = vstv %s87
    %v308 = vmul.f32 %v307, %v199
    %v309 = vstv %s91
    %v310 = vadd.f32 %v309, %v308
    %v311 = vstv %s88
    %v312 = vmul.f32 %v311, %v304
    %v313 = vadd.f32 %v310, %v312
    %v314 = vstv %s89
    %v315 = vmul.f32 %v314, %v305
    %v316 = vadd.f32 %v313, %v315
    %v317 = vstv %s90
    %v318 = vmul.f32 %v317, %v306
    %v319 = vadd.f32 %v316, %v318
    %v320 = vmax.f32 %v319, 1e-06
    %v321 = vstv %s80
    %v322 = vmul.f32 %v321, %v94
    %v323 = vstv %s81
    %v324 = vadd.f32 %v322, %v323
    %v325 = vstv %s82
    %v326 = vmul.f32 %v325, %v199
    %v327 = vstv %s86
    %v328 = vadd.f32 %v327, %v326
    %v329 = vstv %s83
    %v330 = vmul.f32 %v329, %v304
    %v331 = vadd.f32 %v328, %v330
    %v332 = vstv %s84
    %v333 = vmul.f32 %v332, %v305
    %v334 = vadd.f32 %v331, %v333
    %v335 = vstv %s85
    %v336 = vmul.f32 %v335, %v306
    %v337 = vadd.f32 %v334, %v336
    %v338 = vmul.f32 %v324, %v337
    %v339 = vmax.f32 %v338, 1e-06
    %v340 = vmul.f32 %v95, %v339
    %v341 = vlog2.pop %v340
    %v342 = vmul.f32 %v341, 0.6931472
    %v343 = vrcp.pop 0.6931472
    %v344 = vmul.f32 %v342, %v343
    %v345 = vmul.f32 %v344, %v344
    %v346 = vstv %s79
    %v347 = vmul.f32 %v345, %v346
    %v348 = vpow.pop %v347
    %v349 = vmul.f32 %v320, %v348
    %350 = vst [vmem:[#allocation12] sm:$0xff] %v349
    // Predicated region
    $region42: #{tpu_custom_call.1} parent=1 // pred_check
      _
    $region43: #{tpu_custom_call.1} parent=1 // pred_check_branch
      %352 = sbr.rel (0) target = $region45
    $region44: #{tpu_custom_call.1} parent=1 // pred_region
      %s354 = ssub.s32 128, 128
      %355 = vsyncadd [#allocation4], %s354
      %s357 = sshll.u32 [#allocation12], 4
      %s358 = int_to_ptr.vmem [resolvable:$true] %s357
      %360 = dma.vmem_to_hbm [thread:$0]  %s358, 128, %s5, [#allocation4]
    $region45: #{tpu_custom_call.1} parent=1 // pred_fallthru
      _
    // Predicated region
    $region46: #{tpu_custom_call.1} parent=1 // pred_check
      _
    $region47: #{tpu_custom_call.1} parent=1 // pred_check_branch
      %362 = sbr.rel (0) target = $region49
    $region48: #{tpu_custom_call.1} parent=1 // pred_region
      %363 = dma.done [#allocation4], 128
    $region49: #{tpu_custom_call.1} parent=1 // pred_fallthru
      _
    %364 = vsyncpa [#allocation3], 1
    %365 = vsyncpa [#allocation8], 1
    %366 = vsyncpa [#allocation11], 1
    %367 = vsyncpa [#allocation4], 1
    %368 = vsyncpa [#allocation5], 1

</llo_original>
